<compile_context>
chip_gen: v5e
topology: v5e:2x2
jax: 0.10.0
libtpu: 0.0.40
codegen_flags: <defaults>
</compile_context>

<pallas_src>
import functools

import jax
import jax.numpy as jnp
from jax.experimental import pallas as pl
from jax.experimental.pallas import tpu as pltpu


_LANE = 128
# 8192 * 128 * 4 B = 4 MiB per (f32) input per pipeline buffer.
# 2 inputs x 2 buffers = 16 MiB, under the 40 MiB scoped-VMEM limit we set,
# and safe on v5e/v6e (128 MiB physical) and v7x (64 MiB physical per TC).
_MAX_BLOCK_ROWS = 8192


def _cmal_partial_kernel(p1_ref, p3_ref, out_ref, *, block_rows, total_rows):
    """Per-block partial sum of p1*p3, reduced over rows, kept per-lane."""
    i = pl.program_id(0)

    # Cast in-kernel (inputs may be bf16 etc.); f32 accumulation.
    a = p1_ref[...].astype(jnp.float32)
    b = p3_ref[...].astype(jnp.float32)
    prod = a * b

    # Mask rows past the true array extent: the last block may be partial and
    # Pallas does not zero out-of-bounds block regions.
    row_ids = jax.lax.broadcasted_iota(jnp.int32, (block_rows, 1), 0)
    limit = total_rows - i * block_rows
    prod = jnp.where(row_ids < limit, prod, 0.0)

    # Sublane (row) reduce only; the cheap final 128-lane reduce happens in
    # the jitted wrapper on the tiny (num_blocks, 128) partial tensor.
    out_ref[...] = jnp.sum(prod, axis=0, keepdims=True)


@jax.jit
def cmal_uncertainty_pallas(p1, p3):
    """mean(sum(p1 * p3, axis=-1)) over all leading dims -> f32 scalar."""
    assert p1.shape == p3.shape, (p1.shape, p3.shape)
    numel = p1.size
    count = numel // p1.shape[-1]          # number of cells the mean is over
    inv_count = 1.0 / float(count)

    a = p1.reshape(-1)
    b = p3.reshape(-1)

    # Pad only to a 128-lane multiple so the (rows, 128) reshape is legal.
    # Zero padding does not change the sum; the mean uses the TRUE count.
    pad = (-numel) % _LANE
    if pad:
        a = jnp.pad(a, (0, pad))
        b = jnp.pad(b, (0, pad))
    rows = (numel + pad) // _LANE

    if rows <= _MAX_BLOCK_ROWS:
        block_rows = rows                  # single grid step (common case)
        num_blocks = 1
    else:
        block_rows = _MAX_BLOCK_ROWS       # tile rows; last block masked
        num_blocks = pl.cdiv(rows, block_rows)

    a2 = a.reshape(rows, _LANE)
    b2 = b.reshape(rows, _LANE)

    kernel = functools.partial(
        _cmal_partial_kernel, block_rows=block_rows, total_rows=rows)

    in_bytes = (a2.size * a2.dtype.itemsize) + (b2.size * b2.dtype.itemsize)
    partials = pl.pallas_call(
        kernel,
        out_shape=jax.ShapeDtypeStruct((num_blocks, _LANE), jnp.float32),
        grid=(num_blocks,),
        in_specs=[
            pl.BlockSpec((block_rows, _LANE), lambda i: (i, 0)),
            pl.BlockSpec((block_rows, _LANE), lambda i: (i, 0)),
        ],
        out_specs=pl.BlockSpec((1, _LANE), lambda i: (i, 0)),
        compiler_params=pltpu.CompilerParams(
            # No carried state; independent per-block partials -> megacore OK.
            dimension_semantics=("parallel",),
            vmem_limit_bytes=40 << 20,
        ),
        cost_estimate=pl.CostEstimate(
            flops=2 * numel,
            transcendentals=0,
            bytes_accessed=in_bytes + num_blocks * _LANE * 4,
        ),
    )(a2, b2)

    return jnp.sum(partials) * inv_count


class CMALUncertainty:
    """JAX/Pallas port of the PyTorch CMALUncertainty metric (stateless)."""

    def __init__(self):
        pass

    def forward(self, yPred, *args, **kwargs):
        val = cmal_uncertainty_pallas(jnp.asarray(yPred[1]), jnp.asarray(yPred[3]))
        # Matches torch `.item()` semantics (host sync, Python float).
        return float(jax.block_until_ready(val))

    __call__ = forward


def _reference(p1, p3):
    p1 = jnp.asarray(p1, jnp.float32)
    p3 = jnp.asarray(p3, jnp.float32)
    return float(jnp.mean(jnp.sum(p1 * p3, axis=-1)))


if __name__ == "__main__":
    metric = CMALUncertainty()

    # Shapes consistent with the CMAL mixture layout: (batch, time, K).
    N, T, K = 8, 16, 4
    ks = jax.random.split(jax.random.PRNGKey(0), 4)
    yPred = tuple(jax.random.normal(ks[i], (N, T, K), jnp.float32)
                  for i in range(4))
    v1 = metric(yPred)
    ref1 = _reference(yPred[1], yPred[3])
    assert abs(v1 - ref1) < 1e-4 * max(1.0, abs(ref1)), (v1, ref1)

    # Non-128-aligned shape to exercise the minimal lane-padding path.
    N2, T2, K2 = 13, 7, 5
    ks2 = jax.random.split(jax.random.PRNGKey(1), 4)
    yPred2 = tuple(jax.random.normal(ks2[i], (N2, T2, K2), jnp.float32)
                   for i in range(4))
    v2 = metric(yPred2)
    ref2 = _reference(yPred2[1], yPred2[3])
    assert abs(v2 - ref2) < 1e-4 * max(1.0, abs(ref2)), (v2, ref2)

    # bf16 inputs: cast happens inside the kernel (half the HBM traffic).
    yPred3 = tuple(x.astype(jnp.bfloat16) for x in yPred)
    v3 = metric(yPred3)
    ref3 = _reference(yPred3[1], yPred3[3])
    assert abs(v3 - ref3) < 1e-3 * max(1.0, abs(ref3)), (v3, ref3)

    print("KERNEL_OK")
</pallas_src>

<mosaic_0001>
module attributes {stable_mosaic.version = 11 : i64} {
  func.func @_cmal_partial_kernel(%arg0: i32, %arg1: memref<4x128xf32, #tpu.memory_space<vmem>>, %arg2: memref<4x128xf32, #tpu.memory_space<vmem>>, %arg3: memref<1x128xf32, #tpu.memory_space<vmem>>) attributes {dimension_semantics = [#tpu.dimension_semantics<parallel>], iteration_bounds = array<i64: 1>, scalar_prefetch = 0 : i64, scratch_operands = 0 : i64, tpu.core_type = #tpu.core_type<tc>, window_params = [{transform_indices = @transform_0, window_bounds = array<i64: 4, 128>}, {transform_indices = @transform_1, window_bounds = array<i64: 4, 128>}, {transform_indices = @transform_2, window_bounds = array<i64: 1, 128>}]} {
    %c0 = arith.constant 0 : index
    %c0_0 = arith.constant 0 : index
    %0 = vector.load %arg1[%c0, %c0_0] : memref<4x128xf32, #tpu.memory_space<vmem>>, vector<4x128xf32>
    %c0_1 = arith.constant 0 : index
    %c0_2 = arith.constant 0 : index
    %1 = vector.load %arg2[%c0_1, %c0_2] : memref<4x128xf32, #tpu.memory_space<vmem>>, vector<4x128xf32>
    %2 = arith.mulf %0, %1 : vector<4x128xf32>
    %3 = tpu.iota {dimensions = array<i32: 0>} : vector<4x1xi32>
    %c4_i32 = arith.constant 4 : i32
    %4 = arith.muli %arg0, %c4_i32 : i32
    %c4_i32_3 = arith.constant 4 : i32
    %5 = arith.subi %c4_i32_3, %4 : i32
    %6 = vector.broadcast %5 : i32 to vector<4x1xi32>
    %7 = arith.cmpi slt, %3, %6 : vector<4x1xi32>
    %cst = arith.constant 0.000000e+00 : f32
    %8 = vector.shape_cast %7 : vector<4x1xi1> to vector<4x1xi1>
    %9 = vector.broadcast %8 : vector<4x1xi1> to vector<4x128xi1>
    %10 = vector.broadcast %cst : f32 to vector<4x128xf32>
    %11 = arith.select %9, %2, %10 : vector<4x128xi1>, vector<4x128xf32>
    %cst_4 = arith.constant dense<0.000000e+00> : vector<128xf32>
    %12 = vector.multi_reduction <add>, %11, %cst_4 [0] : vector<4x128xf32> to vector<128xf32>
    %13 = vector.shape_cast %12 : vector<128xf32> to vector<1x128xf32>
    %c0_5 = arith.constant 0 : index
    %c0_6 = arith.constant 0 : index
    %14 = vector.load %arg3[%c0_5, %c0_6] : memref<1x128xf32, #tpu.memory_space<vmem>>, vector<1x128xf32>
    tpu.vector_store %arg3[%c0_5, %c0_6], %13 {strides = array<i32>} : memref<1x128xf32, #tpu.memory_space<vmem>>, vector<1x128xf32>,
    return
  }
  func.func @transform_0(%arg0: i32) -> (i32, i32) {
    %c0_i32 = arith.constant 0 : i32
    %c0_i32_0 = arith.constant 0 : i32
    return %arg0, %c0_i32 : i32, i32
  }
  func.func @transform_1(%arg0: i32) -> (i32, i32) {
    %c0_i32 = arith.constant 0 : i32
    %c0_i32_0 = arith.constant 0 : i32
    return %arg0, %c0_i32 : i32, i32
  }
  func.func @transform_2(%arg0: i32) -> (i32, i32) {
    %c0_i32 = arith.constant 0 : i32
    %c0_i32_0 = arith.constant 0 : i32
    return %arg0, %c0_i32 : i32, i32
  }
}

</mosaic_0001>

<llo_original>
// kernel: cmal_uncertainty_pallas.1
$region0: #{cmal_uncertainty_pallas.1}
  #allocation0 [shape = 'u32[]', space=smem, size = 0x4, offset = 0x4, fixed_abs, tag = 'smem constant byte address 0x4 - core index']
  #allocation1 [shape = 'u32[72,128]{1,0:T(1,128)}', space=vmem, size = 0x9000, scoped, tag = 'internal scratch']
  %s0 = inlined_call_operand.vmem [shape: f32[4,128], index: 0, kind: input, shape index: {}]
  %s1 = inlined_call_operand.vmem [shape: f32[4,128], index: 1, kind: input, shape index: {}]
  %s2 = inlined_call_operand.vmem [shape: f32[1,128], index: 2, kind: output, shape index: {}]
  %s3 = sld [smem:[#allocation0]]
  $region18: #{cmal_uncertainty_pallas.1} parent=0
    _
  %s5 = ssub.s32 1, %s3
  %s6 = scalar_select 0, %s5, %s3
  // Predicated region
  $region2: #{cmal_uncertainty_pallas.1} parent=0 // pred_check
    _
  $region3: #{cmal_uncertainty_pallas.1} parent=0 // pred_check_branch
    %8 = sbr.rel (0) target = $region5
  $region4: #{cmal_uncertainty_pallas.1} parent=0 // pred_region
    _
  $region5: #{cmal_uncertainty_pallas.1} parent=0 // pred_fallthru
    _
  // Predicated region
  $region6: #{cmal_uncertainty_pallas.1} parent=0 // pred_check
    _
  $region7: #{cmal_uncertainty_pallas.1} parent=0 // pred_check_branch
    %10 = sbr.rel (0) target = $region9
  $region8: #{cmal_uncertainty_pallas.1} parent=0 // pred_region
    _
  $region9: #{cmal_uncertainty_pallas.1} parent=0 // pred_fallthru
    _
  %v11 = vld [vmem:[%s0] sm:$0xf]
  %v12 = vld [vmem:[%s1] sm:$0xf]
  %v13 = vmul.f32 %v11, %v12
  %v14 = vlaneseq
  %v15 = vshrl.u32 %v14, 7
  %s16 = smul.u32 0, 4
  %s17 = ssub.s32 4, %s16
  %v18 = vstv %s17
  %vm19 = vcmp.lt.s32.totalorder %v15, %v18
  %v20 = vsel %vm19, 1, 0
  %vm21 = vcmp.eq.s32.totalorder %v20, 1
  %v22 = vsel %vm21, %v13, 0.0
  %vm23 = vcmask 1043456
  %v24 = vsel %vm23, %v22, 0.0
  %v25 = vrot.slane %v24, 4
  %v26 = vadd.f32 %v24, %v25
  %v27 = vrot.slane %v26, 2
  %v28 = vadd.f32 %v26, %v27
  %v29 = vrot.slane %v28, 1
  %v30 = vadd.f32 %v28, %v29
  %31 = vst [vmem:[%s2] sm:$0x1] %v30
  // Predicated region
  $region10: #{cmal_uncertainty_pallas.1} parent=0 // pred_check
    _
  $region11: #{cmal_uncertainty_pallas.1} parent=0 // pred_check_branch
    %33 = sbr.rel (0) target = $region13
  $region12: #{cmal_uncertainty_pallas.1} parent=0 // pred_region
    _
  $region13: #{cmal_uncertainty_pallas.1} parent=0 // pred_fallthru
    _
  // Predicated region
  $region14: #{cmal_uncertainty_pallas.1} parent=0 // pred_check
    _
  $region15: #{cmal_uncertainty_pallas.1} parent=0 // pred_check_branch
    %35 = sbr.rel (0) target = $region17
  $region16: #{cmal_uncertainty_pallas.1} parent=0 // pred_region
    _
  $region17: #{cmal_uncertainty_pallas.1} parent=0 // pred_fallthru
    _

</llo_original>
